<compile_context>
chip_gen: v5e
topology: v5e:2x2
jax: 0.10.0
libtpu: 0.0.40
codegen_flags: <defaults>
</compile_context>

<pallas_src>
import functools

import jax
import jax.numpy as jnp
from jax.experimental import pallas as pl
from jax.experimental.pallas import tpu as pltpu


def classifier_kernel(vq_ref, w1_ref, b1_ref, w2_ref, b2_ref, o_ref, *,
                      in_f, gate_f32):
    # Single concatenated activation tile [tb, 2*in_f] (bf16); static split.
    vq = vq_ref[...]
    v = vq[:, :in_f]
    q = vq[:, in_f:]

    # Gate: x = v * relu(q).  bf16 on v6e/v7x (bf16 VALU), f32 on v5e.
    if gate_f32:
        x = (v.astype(jnp.float32) *
             jnp.maximum(q.astype(jnp.float32), 0.0)).astype(jnp.bfloat16)
    else:
        x = v * jnp.maximum(q, 0.0)          # stays bf16

    # lin1: relu(x @ (s1*V1) + b1) -- weight-norm scale already folded into
    # the bf16 weights, f32 MXU accumulation.
    h = jnp.dot(x, w1_ref[...], preferred_element_type=jnp.float32)
    h = jnp.maximum(h + b1_ref[...], 0.0)

    # lin2: h @ (s2*V2) + b2   (drop=0.0 -> dropout is identity)
    out = jnp.dot(h.astype(jnp.bfloat16), w2_ref[...],
                  preferred_element_type=jnp.float32)
    out = out + b2_ref[...]

    o_ref[...] = out.astype(o_ref.dtype)


def classifier_forward(v, q, w1, b1, w2, b2, *, block_rows=2048,
                       out_dtype=None, gate_f32=None):
    """v, q: [B, in_f].  w1: [in_f, mid_p] bf16 (scale folded), b1: [1, mid_p] f32,
    w2: [mid_p, out_f] bf16 (scale folded), b2: [1, out_f] f32."""
    B, in_f = v.shape
    mid_p = w1.shape[1]
    out_f = w2.shape[1]
    if out_dtype is None:
        out_dtype = v.dtype

    # Generation-dependent choices (safe fallbacks if detection fails).
    try:
        kind = jax.devices()[0].device_kind.lower()
    except Exception:
        kind = ""
    if gate_f32 is None:
        gate_f32 = "v5" in kind          # v5e VPU has no bf16 path
    n_tc = 2 if "v7" in kind else 1      # v7x: 2 TensorCores per chip

    # One bf16 activation stream: [B, 2*in_f].
    vq = jnp.concatenate([v, q], axis=1).astype(jnp.bfloat16)

    # Batch tile: as large as possible on single-TC chips (few grid steps),
    # but at least n_tc steps so the "parallel" axis uses both v7x cores.
    tb = min(block_rows, -(-B // n_tc))
    tb = max(8, -(-tb // 8) * 8)          # round up to multiple of 8 sublanes
    Bp = -(-B // tb) * tb                 # pad batch to a multiple of tb
    if Bp != B:
        vq = jnp.pad(vq, ((0, Bp - B), (0, 0)))

    grid = (Bp // tb,)

    flops = 2 * Bp * in_f * mid_p + 2 * Bp * mid_p * out_f + 2 * Bp * in_f
    bytes_accessed = (
        Bp * 2 * in_f * 2                               # vq read (bf16)
        + Bp * out_f * jnp.dtype(out_dtype).itemsize    # output write
        + in_f * mid_p * 2 + mid_p * out_f * 2          # bf16 weights
        + (mid_p + out_f) * 4                           # f32 biases
    )

    kernel = functools.partial(classifier_kernel, in_f=in_f, gate_f32=gate_f32)

    out = pl.pallas_call(
        kernel,
        out_shape=jax.ShapeDtypeStruct((Bp, out_f), out_dtype),
        grid_spec=pl.GridSpec(
            grid=grid,
            in_specs=[
                # batch-tiled concatenated activations
                pl.BlockSpec((tb, 2 * in_f), lambda i: (i, 0)),
                # weights/biases: constant block index -> stay VMEM-resident
                pl.BlockSpec((in_f, mid_p), lambda i: (0, 0)),
                pl.BlockSpec((1, mid_p), lambda i: (0, 0)),
                pl.BlockSpec((mid_p, out_f), lambda i: (0, 0)),
                pl.BlockSpec((1, out_f), lambda i: (0, 0)),
            ],
            out_specs=pl.BlockSpec((tb, out_f), lambda i: (i, 0)),
        ),
        compiler_params=pltpu.CompilerParams(
            dimension_semantics=("parallel",)),
        cost_estimate=pl.CostEstimate(
            flops=flops, transcendentals=0, bytes_accessed=bytes_accessed),
    )(vq, w1, b1, w2, b2)

    return out[:B]


def make_weight_norm_linear(key, in_f, out_f):
    """Deterministic init mimicking weight_norm(nn.Linear(in_f, out_f), dim=None).

    Returns (V^T [in_f, out_f] f32, bias [1, out_f] f32, scale g/||V||_F f32)."""
    kv, kb = jax.random.split(key, 2)
    bound = float(in_f) ** -0.5
    V = jax.random.uniform(kv, (out_f, in_f), jnp.float32, -bound, bound)  # torch [out, in]
    b = jax.random.uniform(kb, (out_f,), jnp.float32, -bound, bound)
    # weight_norm with dim=None: scalar g initialized to ||V||_F, so s == 1 at
    # init; kept explicit so a trained g still folds into the weights below.
    g = jnp.linalg.norm(V)
    s = g / jnp.linalg.norm(V)
    return V.T, b.reshape(1, out_f), s


def prep_params(w1, b1, s1, w2, b2, s2):
    """Fold the weight-norm scale(s) into the weights, zero-pad the hidden
    (mid) dim to a multiple of 128 (lane-dense intermediates) and cast the
    weights to bf16; biases stay f32.  s1/s2 may be scalars (dim=None) or
    per-output vectors of shape [mid_f]/[out_f] (dim=0) -- both fold the same
    way onto V^T."""
    in_f, mid_f = w1.shape
    out_f = w2.shape[1]
    mid_p = -(-mid_f // 128) * 128

    w1s = (w1 * s1).astype(jnp.float32)
    w2s = (w2 * s2).astype(jnp.float32)

    w1p = jnp.zeros((in_f, mid_p), jnp.float32).at[:, :mid_f].set(w1s)
    b1p = jnp.zeros((1, mid_p), jnp.float32).at[:, :mid_f].set(b1)
    w2p = jnp.zeros((mid_p, out_f), jnp.float32).at[:mid_f, :].set(w2s)

    return (w1p.astype(jnp.bfloat16), b1p,
            w2p.astype(jnp.bfloat16), b2.astype(jnp.float32).reshape(1, out_f))


if __name__ == "__main__":
    # Small shapes consistent with the module's forward (v,q: [B, in_f]).
    B = 64
    in_features = 32
    mid_features = 64
    out_features = 128

    key = jax.random.PRNGKey(0)
    k_v, k_q, k_l1, k_l2 = jax.random.split(key, 4)

    v = jax.random.normal(k_v, (B, in_features), jnp.float32)
    q = jax.random.normal(k_q, (B, in_features), jnp.float32)

    w1, b1, s1 = make_weight_norm_linear(k_l1, in_features, mid_features)
    w2, b2, s2 = make_weight_norm_linear(k_l2, mid_features, out_features)

    params = prep_params(w1, b1, s1, w2, b2, s2)

    out = classifier_forward(v, q, *params)
    jax.block_until_ready(out)

    # Pure-JAX f32 reference (bf16 inputs/weights in the kernel -> loose tol).
    x_ref = v * jnp.maximum(q, 0.0)
    h_ref = jnp.maximum(x_ref @ (w1 * s1) + b1, 0.0)
    o_ref = h_ref @ (w2 * s2) + b2

    assert out.shape == (B, out_features)
    max_err = float(jnp.max(jnp.abs(out.astype(jnp.float32) - o_ref)))
    assert jnp.allclose(out.astype(jnp.float32), o_ref,
                        atol=5e-2, rtol=5e-2), max_err

    print("KERNEL_OK")
</pallas_src>

<mosaic_0001>
module attributes {stable_mosaic.version = 11 : i64} {
  func.func @classifier_kernel(%arg0: i32, %arg1: memref<64x64xbf16, #tpu.memory_space<vmem>>, %arg2: memref<32x128xbf16, #tpu.memory_space<vmem>>, %arg3: memref<1x128xf32, #tpu.memory_space<vmem>>, %arg4: memref<128x128xbf16, #tpu.memory_space<vmem>>, %arg5: memref<1x128xf32, #tpu.memory_space<vmem>>, %arg6: memref<64x128xf32, #tpu.memory_space<vmem>>) attributes {dimension_semantics = [#tpu.dimension_semantics<parallel>], iteration_bounds = array<i64: 1>, scalar_prefetch = 0 : i64, scratch_operands = 0 : i64, tpu.core_type = #tpu.core_type<tc>, window_params = [{transform_indices = @transform_0, window_bounds = array<i64: 64, 64>}, {pipeline_mode = #tpu.pipeline_mode<synchronous>, transform_indices = @transform_1, window_bounds = array<i64: 32, 128>}, {pipeline_mode = #tpu.pipeline_mode<synchronous>, transform_indices = @transform_2, window_bounds = array<i64: 1, 128>}, {pipeline_mode = #tpu.pipeline_mode<synchronous>, transform_indices = @transform_3, window_bounds = array<i64: 128, 128>}, {pipeline_mode = #tpu.pipeline_mode<synchronous>, transform_indices = @transform_4, window_bounds = array<i64: 1, 128>}, {transform_indices = @transform_5, window_bounds = array<i64: 64, 128>}]} {
    %c0 = arith.constant 0 : index
    %c0_0 = arith.constant 0 : index
    %0 = vector.load %arg1[%c0, %c0_0] : memref<64x64xbf16, #tpu.memory_space<vmem>>, vector<64x64xbf16>
    %1 = vector.extract_strided_slice %0 {offsets = [0, 0], sizes = [64, 32], strides = [1, 1]} : vector<64x64xbf16> to vector<64x32xbf16>
    %2 = vector.extract_strided_slice %0 {offsets = [0, 32], sizes = [64, 32], strides = [1, 1]} : vector<64x64xbf16> to vector<64x32xbf16>
    %cst = arith.constant 0.000000e+00 : bf16
    %3 = vector.broadcast %cst : bf16 to vector<64x32xbf16>
    %4 = arith.maximumf %2, %3 : vector<64x32xbf16>
    %5 = arith.mulf %1, %4 : vector<64x32xbf16>
    %c0_1 = arith.constant 0 : index
    %c0_2 = arith.constant 0 : index
    %6 = vector.load %arg2[%c0_1, %c0_2] : memref<32x128xbf16, #tpu.memory_space<vmem>>, vector<32x128xbf16>
    %cst_3 = arith.constant dense<0.000000e+00> : vector<64x128xf32>
    %7 = tpu.matmul %5, %6, %cst_3 {dimension_numbers = #tpu.dot_dimension_numbers<[1], [0], [0], [1], [0, 0, 1, 1], [], []>} : vector<64x32xbf16>, vector<32x128xbf16>, vector<64x128xf32> -> vector<64x128xf32>
    %c0_4 = arith.constant 0 : index
    %c0_5 = arith.constant 0 : index
    %8 = vector.load %arg3[%c0_4, %c0_5] : memref<1x128xf32, #tpu.memory_space<vmem>>, vector<1x128xf32>
    %9 = vector.broadcast %8 : vector<1x128xf32> to vector<64x128xf32>
    %10 = arith.addf %7, %9 : vector<64x128xf32>
    %cst_6 = arith.constant 0.000000e+00 : f32
    %11 = vector.broadcast %cst_6 : f32 to vector<64x128xf32>
    %12 = arith.maximumf %10, %11 : vector<64x128xf32>
    %13 = arith.truncf %12 : vector<64x128xf32> to vector<64x128xbf16>
    %c0_7 = arith.constant 0 : index
    %c0_8 = arith.constant 0 : index
    %14 = vector.load %arg4[%c0_7, %c0_8] : memref<128x128xbf16, #tpu.memory_space<vmem>>, vector<128x128xbf16>
    %cst_9 = arith.constant dense<0.000000e+00> : vector<64x128xf32>
    %15 = tpu.matmul %13, %14, %cst_9 {dimension_numbers = #tpu.dot_dimension_numbers<[1], [0], [0], [1], [0, 0, 1, 1], [], []>} : vector<64x128xbf16>, vector<128x128xbf16>, vector<64x128xf32> -> vector<64x128xf32>
    %c0_10 = arith.constant 0 : index
    %c0_11 = arith.constant 0 : index
    %16 = vector.load %arg5[%c0_10, %c0_11] : memref<1x128xf32, #tpu.memory_space<vmem>>, vector<1x128xf32>
    %17 = vector.broadcast %16 : vector<1x128xf32> to vector<64x128xf32>
    %18 = arith.addf %15, %17 : vector<64x128xf32>
    %c0_12 = arith.constant 0 : index
    %c0_13 = arith.constant 0 : index
    %19 = vector.load %arg6[%c0_12, %c0_13] : memref<64x128xf32, #tpu.memory_space<vmem>>, vector<64x128xf32>
    tpu.vector_store %arg6[%c0_12, %c0_13], %18 {strides = array<i32>} : memref<64x128xf32, #tpu.memory_space<vmem>>, vector<64x128xf32>,
    return
  }
  func.func @transform_0(%arg0: i32) -> (i32, i32) {
    %c0_i32 = arith.constant 0 : i32
    %c0_i32_0 = arith.constant 0 : i32
    return %arg0, %c0_i32 : i32, i32
  }
  func.func @transform_1(%arg0: i32) -> (i32, i32) {
    %c0_i32 = arith.constant 0 : i32
    %c0_i32_0 = arith.constant 0 : i32
    %c0_i32_1 = arith.constant 0 : i32
    return %c0_i32, %c0_i32_0 : i32, i32
  }
  func.func @transform_2(%arg0: i32) -> (i32, i32) {
    %c0_i32 = arith.constant 0 : i32
    %c0_i32_0 = arith.constant 0 : i32
    %c0_i32_1 = arith.constant 0 : i32
    return %c0_i32, %c0_i32_0 : i32, i32
  }
  func.func @transform_3(%arg0: i32) -> (i32, i32) {
    %c0_i32 = arith.constant 0 : i32
    %c0_i32_0 = arith.constant 0 : i32
    %c0_i32_1 = arith.constant 0 : i32
    return %c0_i32, %c0_i32_0 : i32, i32
  }
  func.func @transform_4(%arg0: i32) -> (i32, i32) {
    %c0_i32 = arith.constant 0 : i32
    %c0_i32_0 = arith.constant 0 : i32
    %c0_i32_1 = arith.constant 0 : i32
    return %c0_i32, %c0_i32_0 : i32, i32
  }
  func.func @transform_5(%arg0: i32) -> (i32, i32) {
    %c0_i32 = arith.constant 0 : i32
    %c0_i32_0 = arith.constant 0 : i32
    return %arg0, %c0_i32 : i32, i32
  }
}

</mosaic_0001>

<llo_original>
// kernel: tpu_custom_call.1
$region0: #{tpu_custom_call.1}
  #allocation0 [shape = 'u32[]', space=smem, size = 0x4, offset = 0x4, fixed_abs, tag = 'smem constant byte address 0x4 - core index']
  #allocation1 [shape = 'u32[72,128]{1,0:T(1,128)}', space=vmem, size = 0x9000, scoped, tag = 'internal scratch']
  %s0 = inlined_call_operand.hbm [shape: bf16[64,64], index: 0, kind: input, shape index: {}]
  %s1 = inlined_call_operand.hbm [shape: bf16[32,128], index: 1, kind: input, shape index: {}]
  %s2 = inlined_call_operand.vmem [shape: f32[1,128], index: 2, kind: input, shape index: {}]
  %s3 = inlined_call_operand.hbm [shape: bf16[128,128], index: 3, kind: input, shape index: {}]
  %s4 = inlined_call_operand.vmem [shape: f32[1,128], index: 4, kind: input, shape index: {}]
  %s5 = inlined_call_operand.hbm [shape: f32[64,128], index: 5, kind: output, shape index: {}]
  %s6 = sld [smem:[#allocation0]]
  $region42: #{tpu_custom_call.1} parent=0
    _
  %s8 = ssub.s32 1, %s6
  %s9 = scalar_select 0, %s8, %s6
  $region1: #{tpu_custom_call.1} parent=0
    #allocation2 [shape = 'u8[16384]{0}', space=vmem, size = 0x4000, scoped, tag = 'input window, operand 0, single buffered']
    #allocation3 [shape = 's32[1]{0}', space=sflag, size = 0x4, scoped, tag = 'scoped memory for tpu_custom_call.1']
    #allocation4 [shape = 's32[1]{0}', space=sflag, size = 0x4, scoped, tag = 'scoped memory for tpu_custom_call.1']
    #allocation5 [shape = 'u8[8192]{0}', space=vmem, size = 0x2000, scoped, tag = 'input window, operand 1, single buffered']
    #allocation6 [shape = 's32[1]{0}', space=sflag, size = 0x4, scoped, tag = 'scoped memory for tpu_custom_call.1']
    #allocation7 [shape = 'u8[32768]{0}', space=vmem, size = 0x8000, scoped, tag = 'input window, operand 3, single buffered']
    #allocation8 [shape = 'u8[32768]{0}', space=vmem, size = 0x8000, scoped, tag = 'output window, operand 0, single buffered']
    %10 = vsyncpa [#allocation3], 0
    %11 = vsyncpa [#allocation6], 0
    %12 = vsyncpa [#allocation4], 0
    // Predicated region
    $region2: #{tpu_custom_call.1} parent=1 // pred_check
      _
    $region3: #{tpu_custom_call.1} parent=1 // pred_check_branch
      %14 = sbr.rel (0) target = $region5
    $region4: #{tpu_custom_call.1} parent=1 // pred_region
      %16 = vsyncadd [#allocation3], 0
      %s17 = sshll.u32 %s0, 4
      %s18 = int_to_ptr.hbm [resolvable:$true] %s17
      %s19 = sshll.u32 [#allocation2], 4
      %s20 = int_to_ptr.vmem [resolvable:$true] %s19
      %25 = dma.hbm_to_vmem [thread:$0]  %s18, 512, %s20, [#allocation3], 64, 64, 4
    $region5: #{tpu_custom_call.1} parent=1 // pred_fallthru
      _
    // Predicated region
    $region6: #{tpu_custom_call.1} parent=1 // pred_check
      _
    $region7: #{tpu_custom_call.1} parent=1 // pred_check_branch
      %27 = sbr.rel (0) target = $region9
    $region8: #{tpu_custom_call.1} parent=1 // pred_region
      %29 = vsyncadd [#allocation6], 0
      %s30 = sshll.u32 %s1, 4
      %s31 = int_to_ptr.hbm [resolvable:$true] %s30
      %s32 = sshll.u32 [#allocation5], 4
      %s33 = int_to_ptr.vmem [resolvable:$true] %s32
      %38 = dma.hbm_to_vmem [thread:$0]  %s31, 256, %s33, [#allocation6], 64, 64, 4
    $region9: #{tpu_custom_call.1} parent=1 // pred_fallthru
      _
    // Predicated region
    $region10: #{tpu_custom_call.1} parent=1 // pred_check
      _
    $region11: #{tpu_custom_call.1} parent=1 // pred_check_branch
      %40 = sbr.rel (0) target = $region13
    $region12: #{tpu_custom_call.1} parent=1 // pred_region
      _
    $region13: #{tpu_custom_call.1} parent=1 // pred_fallthru
      _
    // Predicated region
    $region14: #{tpu_custom_call.1} parent=1 // pred_check
      _
    $region15: #{tpu_custom_call.1} parent=1 // pred_check_branch
      %42 = sbr.rel (0) target = $region17
    $region16: #{tpu_custom_call.1} parent=1 // pred_region
      %44 = vsyncadd [#allocation6], 0
      %s45 = sshll.u32 %s3, 4
      %s46 = int_to_ptr.hbm [resolvable:$true] %s45
      %s47 = sshll.u32 [#allocation7], 4
      %s48 = int_to_ptr.vmem [resolvable:$true] %s47
      %53 = dma.hbm_to_vmem [thread:$0]  %s46, 1024, %s48, [#allocation6], 64, 64, 4
    $region17: #{tpu_custom_call.1} parent=1 // pred_fallthru
      _
    // Predicated region
    $region18: #{tpu_custom_call.1} parent=1 // pred_check
      _
    $region19: #{tpu_custom_call.1} parent=1 // pred_check_branch
      %55 = sbr.rel (0) target = $region21
    $region20: #{tpu_custom_call.1} parent=1 // pred_region
      _
    $region21: #{tpu_custom_call.1} parent=1 // pred_fallthru
      _
    // Predicated region
    $region22: #{tpu_custom_call.1} parent=1 // pred_check
      _
    $region23: #{tpu_custom_call.1} parent=1 // pred_check_branch
      %57 = sbr.rel (0) target = $region25
    $region24: #{tpu_custom_call.1} parent=1 // pred_region
      %59 = dma.done [#allocation3], 512
    $region25: #{tpu_custom_call.1} parent=1 // pred_fallthru
      _
    // Predicated region
    $region26: #{tpu_custom_call.1} parent=1 // pred_check
      _
    $region27: #{tpu_custom_call.1} parent=1 // pred_check_branch
      %61 = sbr.rel (0) target = $region29
    $region28: #{tpu_custom_call.1} parent=1 // pred_region
      %63 = dma.done [#allocation6], 256
    $region29: #{tpu_custom_call.1} parent=1 // pred_fallthru
      _
    // Predicated region
    $region30: #{tpu_custom_call.1} parent=1 // pred_check
      _
    $region31: #{tpu_custom_call.1} parent=1 // pred_check_branch
      %65 = sbr.rel (0) target = $region33
    $region32: #{tpu_custom_call.1} parent=1 // pred_region
      %67 = dma.done [#allocation6], 1024
    $region33: #{tpu_custom_call.1} parent=1 // pred_fallthru
      _
    %v69 = vld [vmem:[#allocation2] sm:$0xf]
    %v70 = vld [vmem:[#allocation2 + $0x4] sm:$0xf]
    %v71 = vld [vmem:[#allocation2 + $0x8] sm:$0xf]
    %v72 = vld [vmem:[#allocation2 + $0xc] sm:$0xf]
    %v73 = vld [vmem:[#allocation2 + $0x10] sm:$0xf]
    %v74 = vld [vmem:[#allocation2 + $0x14] sm:$0xf]
    %v75 = vld [vmem:[#allocation2 + $0x18] sm:$0xf]
    %v76 = vld [vmem:[#allocation2 + $0x1c] sm:$0xf]
    %v77 = vunpack.c.l.bf16 %v69
    %v78 = vunpack.c.l.bf16 %v70
    %v79 = vunpack.c.l.bf16 %v71
    %v80 = vunpack.c.l.bf16 %v72
    %v81 = vunpack.c.l.bf16 %v73
    %v82 = vunpack.c.l.bf16 %v74
    %v83 = vunpack.c.l.bf16 %v75
    %v84 = vunpack.c.l.bf16 %v76
    %v85 = vmax.f32 %v77, 0.0
    %v86 = vmax.f32 %v78, 0.0
    %v87 = vmax.f32 %v79, 0.0
    %v88 = vmax.f32 %v80, 0.0
    %v89 = vmax.f32 %v81, 0.0
    %v90 = vmax.f32 %v82, 0.0
    %v91 = vmax.f32 %v83, 0.0
    %v92 = vmax.f32 %v84, 0.0
    %v93 = vpack.c.bf16 %v85, %v85
    %v94 = vpack.c.bf16 %v86, %v86
    %v95 = vpack.c.bf16 %v87, %v87
    %v96 = vpack.c.bf16 %v88, %v88
    %v97 = vpack.c.bf16 %v89, %v89
    %v98 = vpack.c.bf16 %v90, %v90
    %v99 = vpack.c.bf16 %v91, %v91
    %v100 = vpack.c.bf16 %v92, %v92
    %v101 = vunpack.c.l.bf16 %v93
    %v102 = vunpack.c.l.bf16 %v94
    %v103 = vunpack.c.l.bf16 %v95
    %v104 = vunpack.c.l.bf16 %v96
    %v105 = vunpack.c.l.bf16 %v97
    %v106 = vunpack.c.l.bf16 %v98
    %v107 = vunpack.c.l.bf16 %v99
    %v108 = vunpack.c.l.bf16 %v100
    %117 = vrot.lane.b32.xlu0 %v101, 96
    %v118 = vpop.permute.xlu0 %117
    %119 = vrot.lane.b32.xlu0 %v102, 96
    %v120 = vpop.permute.xlu0 %119
    %121 = vrot.lane.b32.xlu0 %v103, 96
    %v122 = vpop.permute.xlu0 %121
    %123 = vrot.lane.b32.xlu0 %v104, 96
    %v124 = vpop.permute.xlu0 %123
    %125 = vrot.lane.b32.xlu0 %v105, 96
    %v126 = vpop.permute.xlu0 %125
    %127 = vrot.lane.b32.xlu0 %v106, 96
    %v128 = vpop.permute.xlu0 %127
    %129 = vrot.lane.b32.xlu0 %v107, 96
    %v130 = vpop.permute.xlu0 %129
    %131 = vrot.lane.b32.xlu0 %v108, 96
    %v132 = vpop.permute.xlu0 %131
    %v141 = vmul.f32 %v77, %v118
    %v142 = vmul.f32 %v78, %v120
    %v143 = vmul.f32 %v79, %v122
    %v144 = vmul.f32 %v80, %v124
    %v145 = vmul.f32 %v81, %v126
    %v146 = vmul.f32 %v82, %v128
    %v147 = vmul.f32 %v83, %v130
    %v148 = vmul.f32 %v84, %v132
    %v149 = vpack.c.bf16 %v142, %v141
    %v150 = vpack.c.bf16 %v144, %v143
    %v151 = vpack.c.bf16 %v146, %v145
    %v152 = vpack.c.bf16 %v148, %v147
    %v153 = vld [vmem:[#allocation5] sm:$0xf]
    %v154 = vld [vmem:[#allocation5 + $0x4] sm:$0xf]
    %v155 = vld [vmem:[#allocation5 + $0x8] sm:$0xf]
    %v156 = vld [vmem:[#allocation5 + $0xc] sm:$0xf]
    %v157 = vld [vmem:[%s2] sm:$0x1]
    %v159 = vperm.slane %v157, 0
    %v165 = vunpack.c.l.b16 %v153
    %v166 = vunpack.c.l.b16 %v154
    %v167 = vunpack.c.l.b16 %v155
    %v168 = vunpack.c.l.b16 %v156
    %v169 = vpack.c.b16 %v166, %v165
    %v170 = vpack.c.b16 %v168, %v167
    %vm173 = vcmask 261120
    %v175 = vsel %vm173, %v149, 0
    %v178 = vsel %vm173, %v150, 0
    %v181 = vsel %vm173, %v151, 0
    %v184 = vsel %vm173, %v152, 0
    %186 = vmatpush.bf16.msra.mxu0 0
    %187 = vmatpush.bf16.msra.mxu0 0
    %188 = vmatpush.bf16.msra.mxu0 0
    %189 = vmatpush.bf16.msra.mxu0 0
    %190 = vmatpush.bf16.msra.mxu0 0
    %191 = vmatpush.bf16.msra.mxu0 0
    %192 = vmatpush.bf16.msra.mxu0 %v170
    %193 = vmatpush.bf16.msra.mxu0 %v169
    %194 = vmatmul.bf16.gmra.mxu0 %v175
    %v195 = vpop.f32.mrf.mxu0
    %v196 = vadd.f32 %v159, %v195
    %v197 = vpop.f32.mrf.mxu0
    %v198 = vadd.f32 %v159, %v197
    %199 = vmatmul.bf16.gmra.mxu0 %v178
    %v200 = vpop.f32.mrf.mxu0
    %v201 = vadd.f32 %v159, %v200
    %v202 = vpop.f32.mrf.mxu0
    %v203 = vadd.f32 %v159, %v202
    %204 = vmatmul.bf16.gmra.mxu0 %v181
    %v205 = vpop.f32.mrf.mxu0
    %v206 = vadd.f32 %v159, %v205
    %v207 = vpop.f32.mrf.mxu0
    %v208 = vadd.f32 %v159, %v207
    %209 = vmatmul.bf16.gmra.mxu0 %v184
    %v210 = vpop.f32.mrf.mxu0
    %v211 = vadd.f32 %v159, %v210
    %v212 = vpop.f32.mrf.mxu0
    %v213 = vadd.f32 %v159, %v212
    %214 = vdwg.mxu0
    %v215 = vmax.f32 %v196, 0.0
    %v216 = vmax.f32 %v198, 0.0
    %v217 = vmax.f32 %v201, 0.0
    %v218 = vmax.f32 %v203, 0.0
    %v219 = vmax.f32 %v206, 0.0
    %v220 = vmax.f32 %v208, 0.0
    %v221 = vmax.f32 %v211, 0.0
    %v222 = vmax.f32 %v213, 0.0
    %v223 = vpack.c.bf16 %v216, %v215
    %v224 = vpack.c.bf16 %v218, %v217
    %v225 = vpack.c.bf16 %v220, %v219
    %v226 = vpack.c.bf16 %v222, %v221
    %v227 = vld [vmem:[#allocation7] sm:$0xf]
    %v228 = vld [vmem:[#allocation7 + $0x4] sm:$0xf]
    %v229 = vld [vmem:[#allocation7 + $0x8] sm:$0xf]
    %v230 = vld [vmem:[#allocation7 + $0xc] sm:$0xf]
    %v231 = vld [vmem:[#allocation7 + $0x10] sm:$0xf]
    %v232 = vld [vmem:[#allocation7 + $0x14] sm:$0xf]
    %v233 = vld [vmem:[#allocation7 + $0x18] sm:$0xf]
    %v234 = vld [vmem:[#allocation7 + $0x1c] sm:$0xf]
    %v235 = vld [vmem:[#allocation7 + $0x20] sm:$0xf]
    %v236 = vld [vmem:[#allocation7 + $0x24] sm:$0xf]
    %v237 = vld [vmem:[#allocation7 + $0x28] sm:$0xf]
    %v238 = vld [vmem:[#allocation7 + $0x2c] sm:$0xf]
    %v239 = vld [vmem:[#allocation7 + $0x30] sm:$0xf]
    %v240 = vld [vmem:[#allocation7 + $0x34] sm:$0xf]
    %v241 = vld [vmem:[#allocation7 + $0x38] sm:$0xf]
    %v242 = vld [vmem:[#allocation7 + $0x3c] sm:$0xf]
    %v243 = vld [vmem:[%s4] sm:$0x1]
    %v245 = vperm.slane %v243, 0
    %v263 = vunpack.c.l.b16 %v227
    %v264 = vunpack.c.l.b16 %v228
    %v265 = vunpack.c.l.b16 %v229
    %v266 = vunpack.c.l.b16 %v230
    %v267 = vunpack.c.l.b16 %v231
    %v268 = vunpack.c.l.b16 %v232
    %v269 = vunpack.c.l.b16 %v233
    %v270 = vunpack.c.l.b16 %v234
    %v271 = vunpack.c.l.b16 %v235
    %v272 = vunpack.c.l.b16 %v236
    %v273 = vunpack.c.l.b16 %v237
    %v274 = vunpack.c.l.b16 %v238
    %v275 = vunpack.c.l.b16 %v239
    %v276 = vunpack.c.l.b16 %v240
    %v277 = vunpack.c.l.b16 %v241
    %v278 = vunpack.c.l.b16 %v242
    %v279 = vpack.c.b16 %v264, %v263
    %v280 = vpack.c.b16 %v266, %v265
    %v281 = vpack.c.b16 %v268, %v267
    %v282 = vpack.c.b16 %v270, %v269
    %v283 = vpack.c.b16 %v272, %v271
    %v284 = vpack.c.b16 %v274, %v273
    %v285 = vpack.c.b16 %v276, %v275
    %v286 = vpack.c.b16 %v278, %v277
    %295 = vmatpush.bf16.msra.mxu0 %v286
    %296 = vmatpush.bf16.msra.mxu0 %v285
    %297 = vmatpush.bf16.msra.mxu0 %v284
    %298 = vmatpush.bf16.msra.mxu0 %v283
    %299 = vmatpush.bf16.msra.mxu0 %v282
    %300 = vmatpush.bf16.msra.mxu0 %v281
    %301 = vmatpush.bf16.msra.mxu0 %v280
    %302 = vmatpush.bf16.msra.mxu0 %v279
    %303 = vmatmul.bf16.gmra.mxu0 %v223
    %v304 = vpop.f32.mrf.mxu0
    %v305 = vadd.f32 %v245, %v304
    %v306 = vpop.f32.mrf.mxu0
    %v307 = vadd.f32 %v245, %v306
    %308 = vmatmul.bf16.gmra.mxu0 %v224
    %v309 = vpop.f32.mrf.mxu0
    %v310 = vadd.f32 %v245, %v309
    %v311 = vpop.f32.mrf.mxu0
    %v312 = vadd.f32 %v245, %v311
    %313 = vmatmul.bf16.gmra.mxu0 %v225
    %v314 = vpop.f32.mrf.mxu0
    %v315 = vadd.f32 %v245, %v314
    %v316 = vpop.f32.mrf.mxu0
    %v317 = vadd.f32 %v245, %v316
    %318 = vmatmul.bf16.gmra.mxu0 %v226
    %v319 = vpop.f32.mrf.mxu0
    %v320 = vadd.f32 %v245, %v319
    %v321 = vpop.f32.mrf.mxu0
    %v322 = vadd.f32 %v245, %v321
    %323 = vdwg.mxu0
    %324 = vst [vmem:[#allocation8] sm:$0xff] %v305
    %325 = vst [vmem:[#allocation8 + $0x8] sm:$0xff] %v307
    %326 = vst [vmem:[#allocation8 + $0x10] sm:$0xff] %v310
    %327 = vst [vmem:[#allocation8 + $0x18] sm:$0xff] %v312
    %328 = vst [vmem:[#allocation8 + $0x20] sm:$0xff] %v315
    %329 = vst [vmem:[#allocation8 + $0x28] sm:$0xff] %v317
    %330 = vst [vmem:[#allocation8 + $0x30] sm:$0xff] %v320
    %331 = vst [vmem:[#allocation8 + $0x38] sm:$0xff] %v322
    // Predicated region
    $region34: #{tpu_custom_call.1} parent=1 // pred_check
      _
    $region35: #{tpu_custom_call.1} parent=1 // pred_check_branch
      %333 = sbr.rel (0) target = $region37
    $region36: #{tpu_custom_call.1} parent=1 // pred_region
      %335 = vsyncadd [#allocation4], 0
      %s336 = sshll.u32 [#allocation8], 4
      %s337 = int_to_ptr.vmem [resolvable:$true] %s336
      %s338 = sshll.u32 %s5, 4
      %s339 = int_to_ptr.hbm [resolvable:$true] %s338
      %344 = dma.vmem_to_hbm [thread:$0]  %s337, 1024, %s339, [#allocation4], 128, 128, 8
    $region37: #{tpu_custom_call.1} parent=1 // pred_fallthru
      _
    // Predicated region
    $region38: #{tpu_custom_call.1} parent=1 // pred_check
      _
    $region39: #{tpu_custom_call.1} parent=1 // pred_check_branch
      %346 = sbr.rel (0) target = $region41
    $region40: #{tpu_custom_call.1} parent=1 // pred_region
      %348 = dma.done [#allocation4], 1024
    $region41: #{tpu_custom_call.1} parent=1 // pred_fallthru
      _
    %349 = vsyncpa [#allocation3], 1
    %350 = vsyncpa [#allocation6], 1
    %351 = vsyncpa [#allocation4], 1

</llo_original>
